<compile_context>
chip_gen: v7x
topology: tpu7x:2x2x1
jax: 0.10.0
libtpu: 0.0.40
codegen_flags: <defaults>
</compile_context>

<pallas_src>
import jax
import jax.numpy as jnp
from jax.experimental import pallas as pl
from jax.experimental.pallas import tpu as pltpu


def _trainunit_kernel(x_ref, w1t_ref, b1_ref, w2t_ref, b2_ref,
                      w3_ref, b3_ref, w4_ref, b4_ref, o_ref):
    # x_ref: (B, 3, N) f32 -- native NCL layout; points on lanes, channels on sublanes.
    x = x_ref[...]
    w1t = w1t_ref[...]                                        # (64, 3) f32
    batch = x.shape[0]

    # ---- feature encoder ----------------------------------------------------
    # Layer 1 (3 -> 64): K=3 would waste the MXU; three VPU broadcast-FMAs,
    # computed channels-on-sublanes / points-on-lanes straight off NCL input.
    h1 = (x[:, 0:1, :] * w1t[:, 0:1][None, :, :]
          + x[:, 1:2, :] * w1t[:, 1:2][None, :, :]
          + x[:, 2:3, :] * w1t[:, 2:3][None, :, :]
          + b1_ref[...][None, :, :])                          # (B, 64, N) f32
    h1 = jnp.maximum(h1, 0.0)

    # Layer 2 (64 -> 128): batched MXU matmul h2[b] = w2^T @ h1[b],
    # bf16 operands with f32 accumulation. Output keeps channels on sublanes and
    # points on lanes, so no relayout is needed before the pool.
    w2t = w2t_ref[...]                                        # (128, 64) bf16
    w2b = jnp.broadcast_to(w2t, (batch,) + w2t.shape)         # (B, 128, 64) bf16 (once)
    h2 = jnp.einsum('bjk,bkn->bjn', w2b, h1.astype(jnp.bfloat16),
                    preferred_element_type=jnp.float32)
    h2 = jnp.maximum(h2 + b2_ref[...][None, :, :], 0.0)       # (B, 128, N) f32

    # Global max-pool over points: single fused lane (XLU) reduction -> (B, 128),
    # already in the row-major layout the decoder consumes (no transpose, no loop).
    feat = jnp.max(h2, axis=-1)                               # (B, 128) f32

    # ---- reconstructor (decoder), batched with M = B --------------------------
    d1 = jnp.dot(feat.astype(jnp.bfloat16), w3_ref[...],
                 preferred_element_type=jnp.float32) + b3_ref[...]
    d1 = jnp.maximum(d1, 0.0)                                 # (B, 256) f32

    out = jnp.dot(d1.astype(jnp.bfloat16), w4_ref[...],
                  preferred_element_type=jnp.float32) + b4_ref[...]
    o_ref[...] = out                                          # (B, out_pad) lane-dense


def trainunit_forward(x_ncl, params):
    """x_ncl: [B, 3, N] float32 (PyTorch NCL). Returns [B, 3, N] float32."""
    B, C, N = x_ncl.shape
    assert C == 3
    w1, b1, w2, b2, w3, b3, w4, b4 = params

    out_dim = w4.shape[1]                                     # 3 * N
    out_pad = ((out_dim + 127) // 128) * 128                  # lane-dense output width
    pad = out_pad - out_dim
    if pad:
        w4p = jnp.pad(w4, ((0, 0), (0, pad)))                 # zero cols -> exact 0 outputs
        b4p = jnp.pad(b4, ((0, 0), (0, pad)))
    else:                                                     # 3*N already lane-aligned:
        w4p, b4p = w4, b4                                     # no padding, no output slice

    # One-time parameter re-layouts (tiny): layer-1/2 weights transposed & biases as
    # column vectors so the encoder runs directly on NCL input -- no wrapper-side
    # transpose of x, no lane-sparse (B*N, 3) slab, no extra XLA kernel before the call.
    w1t = jnp.transpose(w1)                                   # (64, 3) f32, VPU path
    b1c = jnp.reshape(b1, (-1, 1))                            # (64, 1) f32
    w2t = jnp.transpose(w2).astype(jnp.bfloat16)              # (128, 64) bf16, MXU
    b2c = jnp.reshape(b2, (-1, 1))                            # (128, 1) f32
    w3b = w3.astype(jnp.bfloat16)                             # (128, 256) bf16, MXU
    w4b = w4p.astype(jnp.bfloat16)                            # (256, out_pad) bf16, MXU

    vmem = pl.BlockSpec(memory_space=pltpu.MemorySpace.VMEM)

    out = pl.pallas_call(
        _trainunit_kernel,
        out_shape=jax.ShapeDtypeStruct((B, out_pad), jnp.float32),
        in_specs=[vmem] * 9,                                  # weights/acts explicitly VMEM-resident
        out_specs=vmem,
        compiler_params=pltpu.CompilerParams(vmem_limit_bytes=32 << 20),
    )(x_ncl, w1t, b1c, w2t, b2c, w3b, b3, w4b, b4p)

    if pad:
        out = out[:, :out_dim]
    return out.reshape(B, 3, N)                               # back to NCL, like PyTorch


def trainunit_reference_mixed(x_ncl, params):
    """Pure-JAX reference mirroring the kernel's bf16-on-MXU / f32-accumulate choices."""
    w1, b1, w2, b2, w3, b3, w4, b4 = params
    B, _, N = x_ncl.shape
    x = jnp.transpose(x_ncl, (0, 2, 1)).reshape(B * N, 3)
    h1 = jnp.maximum(x @ w1 + b1, 0.0)
    h2 = jnp.maximum(
        jnp.dot(h1.astype(jnp.bfloat16), w2.astype(jnp.bfloat16),
                preferred_element_type=jnp.float32) + b2, 0.0)
    feat = jnp.max(h2.reshape(B, N, -1), axis=1)              # (B, 128)
    d1 = jnp.maximum(
        jnp.dot(feat.astype(jnp.bfloat16), w3.astype(jnp.bfloat16),
                preferred_element_type=jnp.float32) + b3, 0.0)
    out = jnp.dot(d1.astype(jnp.bfloat16), w4.astype(jnp.bfloat16),
                  preferred_element_type=jnp.float32) + b4
    return out.reshape(B, 3, N)


def trainunit_reference_f32(x_ncl, params):
    """Pure-f32 reference (true full-precision forward, as PyTorch would compute)."""
    w1, b1, w2, b2, w3, b3, w4, b4 = params
    B, _, N = x_ncl.shape
    x = jnp.transpose(x_ncl, (0, 2, 1)).reshape(B * N, 3)
    h1 = jnp.maximum(x @ w1 + b1, 0.0)
    h2 = jnp.maximum(h1 @ w2 + b2, 0.0)
    feat = jnp.max(h2.reshape(B, N, -1), axis=1)
    d1 = jnp.maximum(feat @ w3 + b3, 0.0)
    out = d1 @ w4 + b4
    return out.reshape(B, 3, N)


def init_params(key, n_points):
    """Deterministic parameter init (He-style scaling)."""
    ks = jax.random.split(key, 4)

    def lin(k, fan_in, fan_out):
        w = jax.random.normal(k, (fan_in, fan_out), jnp.float32) * (2.0 / fan_in) ** 0.5
        b = jnp.zeros((1, fan_out), jnp.float32)
        return w, b

    w1, b1 = lin(ks[0], 3, 64)
    w2, b2 = lin(ks[1], 64, 128)
    w3, b3 = lin(ks[2], 128, 256)
    w4, b4 = lin(ks[3], 256, 3 * n_points)
    return (w1, b1, w2, b2, w3, b3, w4, b4)


if __name__ == "__main__":
    B, N = 2, 64
    key = jax.random.PRNGKey(0)
    k_x, k_p = jax.random.split(key)
    x = jax.random.normal(k_x, (B, 3, N), jnp.float32)        # NCL like PyTorch
    params = init_params(k_p, N)

    y = jax.block_until_ready(trainunit_forward(x, params))
    assert y.shape == (B, 3, N), y.shape

    # Tight check vs. a reference with identical mixed-precision choices.
    y_mixed = trainunit_reference_mixed(x, params)
    assert jnp.allclose(y, y_mixed, atol=1e-2, rtol=1e-2), \
        float(jnp.max(jnp.abs(y - y_mixed)))

    # Sanity check vs. a pure-f32 forward (validates the bf16-on-MXU choice).
    y_f32 = trainunit_reference_f32(x, params)
    assert jnp.allclose(y, y_f32, atol=2e-1, rtol=5e-2), \
        float(jnp.max(jnp.abs(y - y_f32)))

    print("KERNEL_OK")
</pallas_src>

<mosaic_0001>
module attributes {stable_mosaic.version = 11 : i64} {
  func.func @_trainunit_kernel(%arg0: memref<2x3x64xf32, #tpu.memory_space<vmem>>, %arg1: memref<64x3xf32, #tpu.memory_space<vmem>>, %arg2: memref<64x1xf32, #tpu.memory_space<vmem>>, %arg3: memref<128x64xbf16, #tpu.memory_space<vmem>>, %arg4: memref<128x1xf32, #tpu.memory_space<vmem>>, %arg5: memref<128x256xbf16, #tpu.memory_space<vmem>>, %arg6: memref<1x256xf32, #tpu.memory_space<vmem>>, %arg7: memref<256x256xbf16, #tpu.memory_space<vmem>>, %arg8: memref<1x256xf32, #tpu.memory_space<vmem>>, %arg9: memref<2x256xf32, #tpu.memory_space<vmem>>) attributes {dimension_semantics = [], scalar_prefetch = 0 : i64, scratch_operands = 0 : i64, tpu.core_type = #tpu.core_type<tc>} {
    %c0 = arith.constant 0 : index
    %c0_0 = arith.constant 0 : index
    %c0_1 = arith.constant 0 : index
    %0 = vector.load %arg0[%c0, %c0_0, %c0_1] : memref<2x3x64xf32, #tpu.memory_space<vmem>>, vector<2x3x64xf32>
    %c0_2 = arith.constant 0 : index
    %c0_3 = arith.constant 0 : index
    %1 = vector.load %arg1[%c0_2, %c0_3] : memref<64x3xf32, #tpu.memory_space<vmem>>, vector<64x3xf32>
    %2 = vector.extract_strided_slice %0 {offsets = [0, 0, 0], sizes = [2, 1, 64], strides = [1, 1, 1]} : vector<2x3x64xf32> to vector<2x1x64xf32>
    %3 = vector.extract_strided_slice %1 {offsets = [0, 0], sizes = [64, 1], strides = [1, 1]} : vector<64x3xf32> to vector<64x1xf32>
    %4 = vector.shape_cast %3 : vector<64x1xf32> to vector<1x64x1xf32>
    %5 = vector.broadcast %2 : vector<2x1x64xf32> to vector<2x64x64xf32>
    %6 = vector.broadcast %4 : vector<1x64x1xf32> to vector<2x64x64xf32>
    %7 = arith.mulf %5, %6 : vector<2x64x64xf32>
    %8 = vector.extract_strided_slice %0 {offsets = [0, 1, 0], sizes = [2, 1, 64], strides = [1, 1, 1]} : vector<2x3x64xf32> to vector<2x1x64xf32>
    %9 = vector.extract_strided_slice %1 {offsets = [0, 1], sizes = [64, 1], strides = [1, 1]} : vector<64x3xf32> to vector<64x1xf32>
    %10 = vector.shape_cast %9 : vector<64x1xf32> to vector<1x64x1xf32>
    %11 = vector.broadcast %8 : vector<2x1x64xf32> to vector<2x64x64xf32>
    %12 = vector.broadcast %10 : vector<1x64x1xf32> to vector<2x64x64xf32>
    %13 = arith.mulf %11, %12 : vector<2x64x64xf32>
    %14 = arith.addf %7, %13 : vector<2x64x64xf32>
    %15 = vector.extract_strided_slice %0 {offsets = [0, 2, 0], sizes = [2, 1, 64], strides = [1, 1, 1]} : vector<2x3x64xf32> to vector<2x1x64xf32>
    %16 = vector.extract_strided_slice %1 {offsets = [0, 2], sizes = [64, 1], strides = [1, 1]} : vector<64x3xf32> to vector<64x1xf32>
    %17 = vector.shape_cast %16 : vector<64x1xf32> to vector<1x64x1xf32>
    %18 = vector.broadcast %15 : vector<2x1x64xf32> to vector<2x64x64xf32>
    %19 = vector.broadcast %17 : vector<1x64x1xf32> to vector<2x64x64xf32>
    %20 = arith.mulf %18, %19 : vector<2x64x64xf32>
    %21 = arith.addf %14, %20 : vector<2x64x64xf32>
    %c0_4 = arith.constant 0 : index
    %c0_5 = arith.constant 0 : index
    %22 = vector.load %arg2[%c0_4, %c0_5] : memref<64x1xf32, #tpu.memory_space<vmem>>, vector<64x1xf32>
    %23 = vector.shape_cast %22 : vector<64x1xf32> to vector<1x64x1xf32>
    %24 = vector.broadcast %23 : vector<1x64x1xf32> to vector<2x64x64xf32>
    %25 = arith.addf %21, %24 : vector<2x64x64xf32>
    %cst = arith.constant 0.000000e+00 : f32
    %26 = vector.broadcast %cst : f32 to vector<2x64x64xf32>
    %27 = arith.maximumf %25, %26 : vector<2x64x64xf32>
    %c0_6 = arith.constant 0 : index
    %c0_7 = arith.constant 0 : index
    %28 = vector.load %arg3[%c0_6, %c0_7] : memref<128x64xbf16, #tpu.memory_space<vmem>>, vector<128x64xbf16>
    %29 = vector.shape_cast %28 : vector<128x64xbf16> to vector<1x128x64xbf16>
    %30 = vector.broadcast %29 : vector<1x128x64xbf16> to vector<2x128x64xbf16>
    %31 = arith.truncf %27 : vector<2x64x64xf32> to vector<2x64x64xbf16>
    "tpu.trace_start"() <{level = 10 : i32, message = "bjk,bkn->bjn"}> : () -> ()
    %cst_8 = arith.constant dense<0.000000e+00> : vector<2x128x64xf32>
    %32 = tpu.matmul %30, %31, %cst_8 {dimension_numbers = #tpu.dot_dimension_numbers<[2], [1], [1], [2], [0, 0, 0, 1, 1, 2], [0], [0]>} : vector<2x128x64xbf16>, vector<2x64x64xbf16>, vector<2x128x64xf32> -> vector<2x128x64xf32>
    "tpu.trace_stop"() : () -> ()
    %c0_9 = arith.constant 0 : index
    %c0_10 = arith.constant 0 : index
    %33 = vector.load %arg4[%c0_9, %c0_10] : memref<128x1xf32, #tpu.memory_space<vmem>>, vector<128x1xf32>
    %34 = vector.shape_cast %33 : vector<128x1xf32> to vector<1x128x1xf32>
    %35 = vector.broadcast %34 : vector<1x128x1xf32> to vector<2x128x64xf32>
    %36 = arith.addf %32, %35 : vector<2x128x64xf32>
    %cst_11 = arith.constant 0.000000e+00 : f32
    %37 = vector.broadcast %cst_11 : f32 to vector<2x128x64xf32>
    %38 = arith.maximumf %36, %37 : vector<2x128x64xf32>
    %cst_12 = arith.constant dense<0xFF800000> : vector<2x128xf32>
    %39 = vector.multi_reduction <maximumf>, %38, %cst_12 [2] : vector<2x128x64xf32> to vector<2x128xf32>
    %40 = arith.truncf %39 : vector<2x128xf32> to vector<2x128xbf16>
    %c0_13 = arith.constant 0 : index
    %c0_14 = arith.constant 0 : index
    %41 = vector.load %arg5[%c0_13, %c0_14] : memref<128x256xbf16, #tpu.memory_space<vmem>>, vector<128x256xbf16>
    %cst_15 = arith.constant dense<0.000000e+00> : vector<2x256xf32>
    %42 = tpu.matmul %40, %41, %cst_15 {dimension_numbers = #tpu.dot_dimension_numbers<[1], [0], [0], [1], [0, 0, 1, 1], [], []>} : vector<2x128xbf16>, vector<128x256xbf16>, vector<2x256xf32> -> vector<2x256xf32>
    %c0_16 = arith.constant 0 : index
    %c0_17 = arith.constant 0 : index
    %43 = vector.load %arg6[%c0_16, %c0_17] : memref<1x256xf32, #tpu.memory_space<vmem>>, vector<1x256xf32>
    %44 = vector.broadcast %43 : vector<1x256xf32> to vector<2x256xf32>
    %45 = arith.addf %42, %44 : vector<2x256xf32>
    %cst_18 = arith.constant 0.000000e+00 : f32
    %46 = vector.broadcast %cst_18 : f32 to vector<2x256xf32>
    %47 = arith.maximumf %45, %46 : vector<2x256xf32>
    %48 = arith.truncf %47 : vector<2x256xf32> to vector<2x256xbf16>
    %c0_19 = arith.constant 0 : index
    %c0_20 = arith.constant 0 : index
    %49 = vector.load %arg7[%c0_19, %c0_20] : memref<256x256xbf16, #tpu.memory_space<vmem>>, vector<256x256xbf16>
    %cst_21 = arith.constant dense<0.000000e+00> : vector<2x256xf32>
    %50 = tpu.matmul %48, %49, %cst_21 {dimension_numbers = #tpu.dot_dimension_numbers<[1], [0], [0], [1], [0, 0, 1, 1], [], []>} : vector<2x256xbf16>, vector<256x256xbf16>, vector<2x256xf32> -> vector<2x256xf32>
    %c0_22 = arith.constant 0 : index
    %c0_23 = arith.constant 0 : index
    %51 = vector.load %arg8[%c0_22, %c0_23] : memref<1x256xf32, #tpu.memory_space<vmem>>, vector<1x256xf32>
    %52 = vector.broadcast %51 : vector<1x256xf32> to vector<2x256xf32>
    %53 = arith.addf %50, %52 : vector<2x256xf32>
    %c0_24 = arith.constant 0 : index
    %c0_25 = arith.constant 0 : index
    %54 = vector.load %arg9[%c0_24, %c0_25] : memref<2x256xf32, #tpu.memory_space<vmem>>, vector<2x256xf32>
    tpu.vector_store %arg9[%c0_24, %c0_25], %53 {strides = array<i32>} : memref<2x256xf32, #tpu.memory_space<vmem>>, vector<2x256xf32>,
    return
  }
}

</mosaic_0001>

<llo_original>
// kernel: tpu_custom_call.1
$region0: #{tpu_custom_call.1}
  #allocation0 [shape = 'u32[]', space=smem, size = 0x4, offset = 0x4, fixed_abs, tag = 'smem constant byte address 0x4 - core index']
  #allocation1 [shape = 'u32[144,128]{1,0:T(1,128)}', space=vmem, size = 0x12000, scoped, tag = 'internal scratch']
  %s0 = inlined_call_operand.vmem [shape: f32[2,3,64], index: 0, kind: input, shape index: {}]
  %s1 = inlined_call_operand.vmem [shape: f32[64,3], index: 1, kind: input, shape index: {}]
  %s2 = inlined_call_operand.vmem [shape: f32[64,1], index: 2, kind: input, shape index: {}]
  %s3 = inlined_call_operand.vmem [shape: bf16[128,64], index: 3, kind: input, shape index: {}]
  %s4 = inlined_call_operand.vmem [shape: f32[128,1], index: 4, kind: input, shape index: {}]
  %s5 = inlined_call_operand.vmem [shape: bf16[128,256], index: 5, kind: input, shape index: {}]
  %s6 = inlined_call_operand.vmem [shape: f32[1,256], index: 6, kind: input, shape index: {}]
  %s7 = inlined_call_operand.vmem [shape: bf16[256,256], index: 7, kind: input, shape index: {}]
  %s8 = inlined_call_operand.vmem [shape: f32[1,256], index: 8, kind: input, shape index: {}]
  %s9 = inlined_call_operand.hbm [shape: f32[2,256], index: 9, kind: output, shape index: {}]
  %s10 = sld [smem:[#allocation0]]
  $region46: #{tpu_custom_call.1} parent=0
    _
  %s12 = ssub.s32 1, %s10
  %s13 = scalar_select 0, %s12, %s10
  $region1: #{tpu_custom_call.1} parent=0
    #allocation2 [shape = 'u8[2048]{0}', space=vmem, size = 0x800, scoped, tag = 'output window, operand 0, single buffered']
    #allocation3 [shape = 's32[1]{0}', space=sflag, size = 0x4, scoped, tag = 'scoped memory for tpu_custom_call.1']
    %14 = vsyncpa [#allocation3], 0
    // Predicated region
    $region2: #{tpu_custom_call.1} parent=1 // pred_check
      _
    $region3: #{tpu_custom_call.1} parent=1 // pred_check_branch
      %16 = sbr.rel (0) target = $region5
    $region4: #{tpu_custom_call.1} parent=1 // pred_region
      _
    $region5: #{tpu_custom_call.1} parent=1 // pred_fallthru
      _
    // Predicated region
    $region6: #{tpu_custom_call.1} parent=1 // pred_check
      _
    $region7: #{tpu_custom_call.1} parent=1 // pred_check_branch
      %18 = sbr.rel (0) target = $region9
    $region8: #{tpu_custom_call.1} parent=1 // pred_region
      _
    $region9: #{tpu_custom_call.1} parent=1 // pred_fallthru
      _
    // Predicated region
    $region10: #{tpu_custom_call.1} parent=1 // pred_check
      _
    $region11: #{tpu_custom_call.1} parent=1 // pred_check_branch
      %20 = sbr.rel (0) target = $region13
    $region12: #{tpu_custom_call.1} parent=1 // pred_region
      _
    $region13: #{tpu_custom_call.1} parent=1 // pred_fallthru
      _
    // Predicated region
    $region14: #{tpu_custom_call.1} parent=1 // pred_check
      _
    $region15: #{tpu_custom_call.1} parent=1 // pred_check_branch
      %22 = sbr.rel (0) target = $region17
    $region16: #{tpu_custom_call.1} parent=1 // pred_region
      _
    $region17: #{tpu_custom_call.1} parent=1 // pred_fallthru
      _
    // Predicated region
    $region18: #{tpu_custom_call.1} parent=1 // pred_check
      _
    $region19: #{tpu_custom_call.1} parent=1 // pred_check_branch
      %24 = sbr.rel (0) target = $region21
    $region20: #{tpu_custom_call.1} parent=1 // pred_region
      _
    $region21: #{tpu_custom_call.1} parent=1 // pred_fallthru
      _
    // Predicated region
    $region22: #{tpu_custom_call.1} parent=1 // pred_check
      _
    $region23: #{tpu_custom_call.1} parent=1 // pred_check_branch
      %26 = sbr.rel (0) target = $region25
    $region24: #{tpu_custom_call.1} parent=1 // pred_region
      _
    $region25: #{tpu_custom_call.1} parent=1 // pred_fallthru
      _
    // Predicated region
    $region26: #{tpu_custom_call.1} parent=1 // pred_check
      _
    $region27: #{tpu_custom_call.1} parent=1 // pred_check_branch
      %28 = sbr.rel (0) target = $region29
    $region28: #{tpu_custom_call.1} parent=1 // pred_region
      _
    $region29: #{tpu_custom_call.1} parent=1 // pred_fallthru
      _
    // Predicated region
    $region30: #{tpu_custom_call.1} parent=1 // pred_check
      _
    $region31: #{tpu_custom_call.1} parent=1 // pred_check_branch
      %30 = sbr.rel (0) target = $region33
    $region32: #{tpu_custom_call.1} parent=1 // pred_region
      _
    $region33: #{tpu_custom_call.1} parent=1 // pred_fallthru
      _
    // Predicated region
    $region34: #{tpu_custom_call.1} parent=1 // pred_check
      _
    $region35: #{tpu_custom_call.1} parent=1 // pred_check_branch
      %32 = sbr.rel (0) target = $region37
    $region36: #{tpu_custom_call.1} parent=1 // pred_region
      _
    $region37: #{tpu_custom_call.1} parent=1 // pred_fallthru
      _
    %v34 = vld [vmem:[%s0] sm:$0x7]
    %v35 = vld [vmem:[%s0 + $0x4] sm:$0x7]
    %v36 = vld [vmem:[%s1] sm:$0xff]
    %v37 = vld [vmem:[%s1 + $0x8] sm:$0xff]
    %v38 = vld [vmem:[%s1 + $0x10] sm:$0xff]
    %v39 = vld [vmem:[%s1 + $0x18] sm:$0xff]
    %v40 = vld [vmem:[%s1 + $0x20] sm:$0xff]
    %v41 = vld [vmem:[%s1 + $0x28] sm:$0xff]
    %v42 = vld [vmem:[%s1 + $0x30] sm:$0xff]
    %v43 = vld [vmem:[%s1 + $0x38] sm:$0xff]
    %v44 = vlaneseq
    %v45 = vshrl.u32 %v44, 7
    %v46 = vsub.s32 0, %v45
    %v47 = vrot.slane %v34, %v46
    %v48 = vlaneseq
    %v49 = vshrl.u32 %v48, 7
    %v50 = vsub.s32 0, %v49
    %v51 = vrot.slane %v35, %v50
    %53 = vset.pattern.permute.xlu0 0
    %54 = vperm.xlu0 %53, %v36
    %v55 = vpop.permute.xlu0 %54
    %58 = vset.pattern.permute.xlu0 0
    %59 = vperm.xlu0 %58, %v37
    %v60 = vpop.permute.xlu0 %59
    %63 = vset.pattern.permute.xlu0 0
    %64 = vperm.xlu0 %63, %v38
    %v65 = vpop.permute.xlu0 %64
    %68 = vset.pattern.permute.xlu0 0
    %69 = vperm.xlu0 %68, %v39
    %v70 = vpop.permute.xlu0 %69
    %73 = vset.pattern.permute.xlu0 0
    %74 = vperm.xlu0 %73, %v40
    %v75 = vpop.permute.xlu0 %74
    %78 = vset.pattern.permute.xlu0 0
    %79 = vperm.xlu0 %78, %v41
    %v80 = vpop.permute.xlu0 %79
    %83 = vset.pattern.permute.xlu0 0
    %84 = vperm.xlu0 %83, %v42
    %v85 = vpop.permute.xlu0 %84
    %88 = vset.pattern.permute.xlu0 0
    %89 = vperm.xlu0 %88, %v43
    %v90 = vpop.permute.xlu0 %89
    %v92 = vmul.f32 %v47, %v55
    %v93 = vmul.f32 %v47, %v60
    %v94 = vmul.f32 %v47, %v65
    %v95 = vmul.f32 %v47, %v70
    %v96 = vmul.f32 %v47, %v75
    %v97 = vmul.f32 %v47, %v80
    %v98 = vmul.f32 %v47, %v85
    %v99 = vmul.f32 %v47, %v90
    %v100 = vmul.f32 %v51, %v55
    %v101 = vmul.f32 %v51, %v60
    %v102 = vmul.f32 %v51, %v65
    %v103 = vmul.f32 %v51, %v70
    %v104 = vmul.f32 %v51, %v75
    %v105 = vmul.f32 %v51, %v80
    %v106 = vmul.f32 %v51, %v85
    %v107 = vmul.f32 %v51, %v90
    %v108 = vlaneseq
    %v109 = vshrl.u32 %v108, 7
    %v110 = vsub.s32 1, %v109
    %v111 = vrot.slane %v34, %v110
    %v112 = vlaneseq
    %v113 = vshrl.u32 %v112, 7
    %v114 = vsub.s32 1, %v113
    %v115 = vrot.slane %v35, %v114
    %116 = vset.pattern.permute.xlu0 1
    %117 = vperm.xlu0 %116, %v36
    %v118 = vpop.permute.xlu0 %117
    %120 = vset.pattern.permute.xlu0 1
    %121 = vperm.xlu0 %120, %v37
    %v122 = vpop.permute.xlu0 %121
    %124 = vset.pattern.permute.xlu0 1
    %125 = vperm.xlu0 %124, %v38
    %v126 = vpop.permute.xlu0 %125
    %128 = vset.pattern.permute.xlu0 1
    %129 = vperm.xlu0 %128, %v39
    %v130 = vpop.permute.xlu0 %129
    %132 = vset.pattern.permute.xlu0 1
    %133 = vperm.xlu0 %132, %v40
    %v134 = vpop.permute.xlu0 %133
    %136 = vset.pattern.permute.xlu0 1
    %137 = vperm.xlu0 %136, %v41
    %v138 = vpop.permute.xlu0 %137
    %140 = vset.pattern.permute.xlu0 1
    %141 = vperm.xlu0 %140, %v42
    %v142 = vpop.permute.xlu0 %141
    %144 = vset.pattern.permute.xlu0 1
    %145 = vperm.xlu0 %144, %v43
    %v146 = vpop.permute.xlu0 %145
    %v148 = vmul.f32 %v111, %v118
    %v149 = vmul.f32 %v111, %v122
    %v150 = vmul.f32 %v111, %v126
    %v151 = vmul.f32 %v111, %v130
    %v152 = vmul.f32 %v111, %v134
    %v153 = vmul.f32 %v111, %v138
    %v154 = vmul.f32 %v111, %v142
    %v155 = vmul.f32 %v111, %v146
    %v156 = vmul.f32 %v115, %v118
    %v157 = vmul.f32 %v115, %v122
    %v158 = vmul.f32 %v115, %v126
    %v159 = vmul.f32 %v115, %v130
    %v160 = vmul.f32 %v115, %v134
    %v161 = vmul.f32 %v115, %v138
    %v162 = vmul.f32 %v115, %v142
    %v163 = vmul.f32 %v115, %v146
    %v164 = vadd.f32 %v92, %v148
    %v165 = vadd.f32 %v93, %v149
    %v166 = vadd.f32 %v94, %v150
    %v167 = vadd.f32 %v95, %v151
    %v168 = vadd.f32 %v96, %v152
    %v169 = vadd.f32 %v97, %v153
    %v170 = vadd.f32 %v98, %v154
    %v171 = vadd.f32 %v99, %v155
    %v172 = vadd.f32 %v100, %v156
    %v173 = vadd.f32 %v101, %v157
    %v174 = vadd.f32 %v102, %v158
    %v175 = vadd.f32 %v103, %v159
    %v176 = vadd.f32 %v104, %v160
    %v177 = vadd.f32 %v105, %v161
    %v178 = vadd.f32 %v106, %v162
    %v179 = vadd.f32 %v107, %v163
    %v180 = vlaneseq
    %v181 = vshrl.u32 %v180, 7
    %v182 = vsub.s32 2, %v181
    %v183 = vrot.slane %v34, %v182
    %v184 = vlaneseq
    %v185 = vshrl.u32 %v184, 7
    %v186 = vsub.s32 2, %v185
    %v187 = vrot.slane %v35, %v186
    %188 = vset.pattern.permute.xlu0 2
    %189 = vperm.xlu0 %188, %v36
    %v190 = vpop.permute.xlu0 %189
    %192 = vset.pattern.permute.xlu0 2
    %193 = vperm.xlu0 %192, %v37
    %v194 = vpop.permute.xlu0 %193
    %196 = vset.pattern.permute.xlu0 2
    %197 = vperm.xlu0 %196, %v38
    %v198 = vpop.permute.xlu0 %197
    %200 = vset.pattern.permute.xlu0 2
    %201 = vperm.xlu0 %200, %v39
    %v202 = vpop.permute.xlu0 %201
    %204 = vset.pattern.permute.xlu0 2
    %205 = vperm.xlu0 %204, %v40
    %v206 = vpop.permute.xlu0 %205
    %208 = vset.pattern.permute.xlu0 2
    %209 = vperm.xlu0 %208, %v41
    %v210 = vpop.permute.xlu0 %209
    %212 = vset.pattern.permute.xlu0 2
    %213 = vperm.xlu0 %212, %v42
    %v214 = vpop.permute.xlu0 %213
    %216 = vset.pattern.permute.xlu0 2
    %217 = vperm.xlu0 %216, %v43
    %v218 = vpop.permute.xlu0 %217
    %v220 = vmul.f32 %v183, %v190
    %v221 = vmul.f32 %v183, %v194
    %v222 = vmul.f32 %v183, %v198
    %v223 = vmul.f32 %v183, %v202
    %v224 = vmul.f32 %v183, %v206
    %v225 = vmul.f32 %v183, %v210
    %v226 = vmul.f32 %v183, %v214
    %v227 = vmul.f32 %v183, %v218
    %v228 = vmul.f32 %v187, %v190
    %v229 = vmul.f32 %v187, %v194
    %v230 = vmul.f32 %v187, %v198
    %v231 = vmul.f32 %v187, %v202
    %v232 = vmul.f32 %v187, %v206
    %v233 = vmul.f32 %v187, %v210
    %v234 = vmul.f32 %v187, %v214
    %v235 = vmul.f32 %v187, %v218
    %v236 = vadd.f32 %v164, %v220
    %v237 = vadd.f32 %v165, %v221
    %v238 = vadd.f32 %v166, %v222
    %v239 = vadd.f32 %v167, %v223
    %v240 = vadd.f32 %v168, %v224
    %v241 = vadd.f32 %v169, %v225
    %v242 = vadd.f32 %v170, %v226
    %v243 = vadd.f32 %v171, %v227
    %v244 = vadd.f32 %v172, %v228
    %v245 = vadd.f32 %v173, %v229
    %v246 = vadd.f32 %v174, %v230
    %v247 = vadd.f32 %v175, %v231
    %v248 = vadd.f32 %v176, %v232
    %v249 = vadd.f32 %v177, %v233
    %v250 = vadd.f32 %v178, %v234
    %v251 = vadd.f32 %v179, %v235
    %v252 = vld [vmem:[%s2] sm:$0xff]
    %v253 = vld [vmem:[%s2 + $0x8] sm:$0xff]
    %v254 = vld [vmem:[%s2 + $0x10] sm:$0xff]
    %v255 = vld [vmem:[%s2 + $0x18] sm:$0xff]
    %v256 = vld [vmem:[%s2 + $0x20] sm:$0xff]
    %v257 = vld [vmem:[%s2 + $0x28] sm:$0xff]
    %v258 = vld [vmem:[%s2 + $0x30] sm:$0xff]
    %v259 = vld [vmem:[%s2 + $0x38] sm:$0xff]
    %261 = vset.pattern.permute.xlu0 0
    %262 = vperm.xlu0 %261, %v252
    %v263 = vpop.permute.xlu0 %262
    %266 = vset.pattern.permute.xlu0 0
    %267 = vperm.xlu0 %266, %v253
    %v268 = vpop.permute.xlu0 %267
    %271 = vset.pattern.permute.xlu0 0
    %272 = vperm.xlu0 %271, %v254
    %v273 = vpop.permute.xlu0 %272
    %276 = vset.pattern.permute.xlu0 0
    %277 = vperm.xlu0 %276, %v255
    %v278 = vpop.permute.xlu0 %277
    %281 = vset.pattern.permute.xlu0 0
    %282 = vperm.xlu0 %281, %v256
    %v283 = vpop.permute.xlu0 %282
    %286 = vset.pattern.permute.xlu0 0
    %287 = vperm.xlu0 %286, %v257
    %v288 = vpop.permute.xlu0 %287
    %291 = vset.pattern.permute.xlu0 0
    %292 = vperm.xlu0 %291, %v258
    %v293 = vpop.permute.xlu0 %292
    %296 = vset.pattern.permute.xlu0 0
    %297 = vperm.xlu0 %296, %v259
    %v298 = vpop.permute.xlu0 %297
    %v300 = vadd.f32 %v236, %v263
    %v301 = vadd.f32 %v237, %v268
    %v302 = vadd.f32 %v238, %v273
    %v303 = vadd.f32 %v239, %v278
    %v304 = vadd.f32 %v240, %v283
    %v305 = vadd.f32 %v241, %v288
    %v306 = vadd.f32 %v242, %v293
    %v307 = vadd.f32 %v243, %v298
    %v308 = vadd.f32 %v244, %v263
    %v309 = vadd.f32 %v245, %v268
    %v310 = vadd.f32 %v246, %v273
    %v311 = vadd.f32 %v247, %v278
    %v312 = vadd.f32 %v248, %v283
    %v313 = vadd.f32 %v249, %v288
    %v314 = vadd.f32 %v250, %v293
    %v315 = vadd.f32 %v251, %v298
    %v316 = vmax.f32 %v300, 0.0
    %v317 = vmax.f32 %v301, 0.0
    %v318 = vmax.f32 %v302, 0.0
    %v319 = vmax.f32 %v303, 0.0
    %v320 = vmax.f32 %v304, 0.0
    %v321 = vmax.f32 %v305, 0.0
    %v322 = vmax.f32 %v306, 0.0
    %v323 = vmax.f32 %v307, 0.0
    %v324 = vmax.f32 %v308, 0.0
    %v325 = vmax.f32 %v309, 0.0
    %v326 = vmax.f32 %v310, 0.0
    %v327 = vmax.f32 %v311, 0.0
    %v328 = vmax.f32 %v312, 0.0
    %v329 = vmax.f32 %v313, 0.0
    %v330 = vmax.f32 %v314, 0.0
    %v331 = vmax.f32 %v315, 0.0
    %v332 = vld [vmem:[%s3] sm:$0xf]
    %v333 = vld [vmem:[%s3 + $0x4] sm:$0xf]
    %v334 = vld [vmem:[%s3 + $0x8] sm:$0xf]
    %v335 = vld [vmem:[%s3 + $0xc] sm:$0xf]
    %v336 = vld [vmem:[%s3 + $0x10] sm:$0xf]
    %v337 = vld [vmem:[%s3 + $0x14] sm:$0xf]
    %v338 = vld [vmem:[%s3 + $0x18] sm:$0xf]
    %v339 = vld [vmem:[%s3 + $0x1c] sm:$0xf]
    %v340 = vld [vmem:[%s3 + $0x20] sm:$0xf]
    %v341 = vld [vmem:[%s3 + $0x24] sm:$0xf]
    %v342 = vld [vmem:[%s3 + $0x28] sm:$0xf]
    %v343 = vld [vmem:[%s3 + $0x2c] sm:$0xf]
    %v344 = vld [vmem:[%s3 + $0x30] sm:$0xf]
    %v345 = vld [vmem:[%s3 + $0x34] sm:$0xf]
    %v346 = vld [vmem:[%s3 + $0x38] sm:$0xf]
    %v347 = vld [vmem:[%s3 + $0x3c] sm:$0xf]
    %v348 = vpack.c.bf16 %v317, %v316
    %v349 = vpack.c.bf16 %v319, %v318
    %v350 = vpack.c.bf16 %v321, %v320
    %v351 = vpack.c.bf16 %v323, %v322
    %v352 = vpack.c.bf16 %v325, %v324
    %v353 = vpack.c.bf16 %v327, %v326
    %v354 = vpack.c.bf16 %v329, %v328
    %v355 = vpack.c.bf16 %v331, %v330
    %v356 = vld [vmem:[%s4] sm:$0xff]
    %v357 = vld [vmem:[%s4 + $0x8] sm:$0xff]
    %v358 = vld [vmem:[%s4 + $0x10] sm:$0xff]
    %v359 = vld [vmem:[%s4 + $0x18] sm:$0xff]
    %v360 = vld [vmem:[%s4 + $0x20] sm:$0xff]
    %v361 = vld [vmem:[%s4 + $0x28] sm:$0xff]
    %v362 = vld [vmem:[%s4 + $0x30] sm:$0xff]
    %v363 = vld [vmem:[%s4 + $0x38] sm:$0xff]
    %v364 = vld [vmem:[%s4 + $0x40] sm:$0xff]
    %v365 = vld [vmem:[%s4 + $0x48] sm:$0xff]
    %v366 = vld [vmem:[%s4 + $0x50] sm:$0xff]
    %v367 = vld [vmem:[%s4 + $0x58] sm:$0xff]
    %v368 = vld [vmem:[%s4 + $0x60] sm:$0xff]
    %v369 = vld [vmem:[%s4 + $0x68] sm:$0xff]
    %v370 = vld [vmem:[%s4 + $0x70] sm:$0xff]
    %v371 = vld [vmem:[%s4 + $0x78] sm:$0xff]
    %373 = vset.pattern.permute.xlu0 0
    %374 = vperm.xlu0 %373, %v356
    %v375 = vpop.permute.xlu0 %374
    %378 = vset.pattern.permute.xlu0 0
    %379 = vperm.xlu0 %378, %v357
    %v380 = vpop.permute.xlu0 %379
    %383 = vset.pattern.permute.xlu0 0
    %384 = vperm.xlu0 %383, %v358
    %v385 = vpop.permute.xlu0 %384
    %388 = vset.pattern.permute.xlu0 0
    %389 = vperm.xlu0 %388, %v359
    %v390 = vpop.permute.xlu0 %389
    %393 = vset.pattern.permute.xlu0 0
    %394 = vperm.xlu0 %393, %v360
    %v395 = vpop.permute.xlu0 %394
    %398 = vset.pattern.permute.xlu0 0
    %399 = vperm.xlu0 %398, %v361
    %v400 = vpop.permute.xlu0 %399
    %403 = vset.pattern.permute.xlu0 0
    %404 = vperm.xlu0 %403, %v362
    %v405 = vpop.permute.xlu0 %404
    %408 = vset.pattern.permute.xlu0 0
    %409 = vperm.xlu0 %408, %v363
    %v410 = vpop.permute.xlu0 %409
    %413 = vset.pattern.permute.xlu0 0
    %414 = vperm.xlu0 %413, %v364
    %v415 = vpop.permute.xlu0 %414
    %418 = vset.pattern.permute.xlu0 0
    %419 = vperm.xlu0 %418, %v365
    %v420 = vpop.permute.xlu0 %419
    %423 = vset.pattern.permute.xlu0 0
    %424 = vperm.xlu0 %423, %v366
    %v425 = vpop.permute.xlu0 %424
    %428 = vset.pattern.permute.xlu0 0
    %429 = vperm.xlu0 %428, %v367
    %v430 = vpop.permute.xlu0 %429
    %433 = vset.pattern.permute.xlu0 0
    %434 = vperm.xlu0 %433, %v368
    %v435 = vpop.permute.xlu0 %434
    %438 = vset.pattern.permute.xlu0 0
    %439 = vperm.xlu0 %438, %v369
    %v440 = vpop.permute.xlu0 %439
    %443 = vset.pattern.permute.xlu0 0
    %444 = vperm.xlu0 %443, %v370
    %v445 = vpop.permute.xlu0 %444
    %448 = vset.pattern.permute.xlu0 0
    %449 = vperm.xlu0 %448, %v371
    %v450 = vpop.permute.xlu0 %449
    %v468 = vunpack.c.l.b16 %v332
    %v469 = vunpack.c.l.b16 %v333
    %v470 = vunpack.c.l.b16 %v334
    %v471 = vunpack.c.l.b16 %v335
    %v472 = vunpack.c.l.b16 %v336
    %v473 = vunpack.c.l.b16 %v337
    %v474 = vunpack.c.l.b16 %v338
    %v475 = vunpack.c.l.b16 %v339
    %v476 = vunpack.c.l.b16 %v340
    %v477 = vunpack.c.l.b16 %v341
    %v478 = vunpack.c.l.b16 %v342
    %v479 = vunpack.c.l.b16 %v343
    %v480 = vunpack.c.l.b16 %v344
    %v481 = vunpack.c.l.b16 %v345
    %v482 = vunpack.c.l.b16 %v346
    %v483 = vunpack.c.l.b16 %v347
    %v484 = vpack.c.b16 %v469, %v468
    %v485 = vpack.c.b16 %v471, %v470
    %v486 = vpack.c.b16 %v473, %v472
    %v487 = vpack.c.b16 %v475, %v474
    %v488 = vpack.c.b16 %v477, %v476
    %v489 = vpack.c.b16 %v479, %v478
    %v490 = vpack.c.b16 %v481, %v480
    %v491 = vpack.c.b16 %v483, %v482
    %vm492 = vcmask 523264
    %v494 = vsel %vm492, %v484, 0
    %v497 = vsel %vm492, %v485, 0
    %v500 = vsel %vm492, %v486, 0
    %v503 = vsel %vm492, %v487, 0
    %v506 = vsel %vm492, %v488, 0
    %v509 = vsel %vm492, %v489, 0
    %v512 = vsel %vm492, %v490, 0
    %v515 = vsel %vm492, %v491, 0
    %517 = vmatprep.subr.bf16.mxu0 0
    %518 = vmatpush1.bf16.msra.mxu0 %v348
    %519 = vmatprep.subr.bf16.mxu0 0
    %520 = vmatpush1.bf16.msra.mxu0 %v349
    %521 = vmatprep.subr.bf16.mxu0 0
    %522 = vmatpush1.bf16.msra.mxu0 %v350
    %523 = vmatprep.subr.bf16.mxu0 0
    %524 = vmatpush1.bf16.msra.mxu0 %v351
    %525 = vmatprep.subr.bf16.mxu0 0
    %526 = vmatpush1.bf16.msra.mxu0 0
    %527 = vmatprep.subr.bf16.mxu0 0
    %528 = vmatpush1.bf16.msra.mxu0 0
    %529 = vmatprep.subr.bf16.mxu0 0
    %530 = vmatpush1.bf16.msra.mxu0 0
    %531 = vmatprep.subr.bf16.mxu0 0
    %532 = vmatpush1.bf16.msra.mxu0 0
    %533 = vmatprep.subr.bf16.mxu0 0
    %534 = vmatpush1.bf16.msra.mxu0 0
    %535 = vmatprep.subr.bf16.mxu0 0
    %536 = vmatpush1.bf16.msra.mxu0 0
    %537 = vmatprep.subr.bf16.mxu0 0
    %538 = vmatpush1.bf16.msra.mxu0 0
    %539 = vmatprep.subr.bf16.mxu0 0
    %540 = vmatpush1.bf16.msra.mxu0 0
    %541 = vmatprep.subr.bf16.mxu0 0
    %542 = vmatpush1.bf16.msra.mxu0 0
    %543 = vmatprep.subr.bf16.mxu0 0
    %544 = vmatpush1.bf16.msra.mxu0 0
    %545 = vmatprep.subr.bf16.mxu0 0
    %546 = vmatpush1.bf16.msra.mxu0 0
    %547 = vmatprep.subr.bf16.mxu0 0
    %548 = vmatpush1.bf16.msra.mxu0 0
    %549 = vmatprep.mubr.bf16.mxu0 0
    %550 = vmatmul.mubr.bf16.gmra.mrb[0].mxu0 %v494
    %v551 = vpop.f32.mrb[0].mxu0
    %v552 = vadd.f32 %v375, %v551
    %v553 = vpop.f32.mrb[0].mxu0
    %v554 = vpop.f32.mrb[0].mxu0
    %v555 = vadd.f32 %v380, %v554
    %v556 = vpop.f32.mrb[0].mxu0
    %557 = vmatprep.mubr.bf16.mxu0 0
    %558 = vmatmul.mubr.bf16.gmra.mrb[0].mxu0 %v497
    %v559 = vpop.f32.mrb[0].mxu0
    %v560 = vadd.f32 %v385, %v559
    %v561 = vpop.f32.mrb[0].mxu0
    %v562 = vpop.f32.mrb[0].mxu0
    %v563 = vadd.f32 %v390, %v562
    %v564 = vpop.f32.mrb[0].mxu0
    %565 = vmatprep.mubr.bf16.mxu0 0
    %566 = vmatmul.mubr.bf16.gmra.mrb[0].mxu0 %v500
    %v567 = vpop.f32.mrb[0].mxu0
    %v568 = vadd.f32 %v395, %v567
    %v569 = vpop.f32.mrb[0].mxu0
    %v570 = vpop.f32.mrb[0].mxu0
    %v571 = vadd.f32 %v400, %v570
    %v572 = vpop.f32.mrb[0].mxu0
    %573 = vmatprep.mubr.bf16.mxu0 0
    %574 = vmatmul.mubr.bf16.gmra.mrb[0].mxu0 %v503
    %v575 = vpop.f32.mrb[0].mxu0
    %v576 = vadd.f32 %v405, %v575
    %v577 = vpop.f32.mrb[0].mxu0
    %v578 = vpop.f32.mrb[0].mxu0
    %v579 = vadd.f32 %v410, %v578
    %v580 = vpop.f32.mrb[0].mxu0
    %581 = vmatprep.mubr.bf16.mxu0 0
    %582 = vmatmul.mubr.bf16.gmra.mrb[0].mxu0 %v506
    %v583 = vpop.f32.mrb[0].mxu0
    %v584 = vadd.f32 %v415, %v583
    %v585 = vpop.f32.mrb[0].mxu0
    %v586 = vpop.f32.mrb[0].mxu0
    %v587 = vadd.f32 %v420, %v586
    %v588 = vpop.f32.mrb[0].mxu0
    %589 = vmatprep.mubr.bf16.mxu0 0
    %590 = vmatmul.mubr.bf16.gmra.mrb[0].mxu0 %v509
    %v591 = vpop.f32.mrb[0].mxu0
    %v592 = vadd.f32 %v425, %v591
    %v593 = vpop.f32.mrb[0].mxu0
    %v594 = vpop.f32.mrb[0].mxu0
    %v595 = vadd.f32 %v430, %v594
    %v596 = vpop.f32.mrb[0].mxu0
    %597 = vmatprep.mubr.bf16.mxu0 0
    %598 = vmatmul.mubr.bf16.gmra.mrb[0].mxu0 %v512
    %v599 = vpop.f32.mrb[0].mxu0
    %v600 = vadd.f32 %v435, %v599
    %v601 = vpop.f32.mrb[0].mxu0
    %v602 = vpop.f32.mrb[0].mxu0
    %v603 = vadd.f32 %v440, %v602
    %v604 = vpop.f32.mrb[0].mxu0
    %605 = vmatprep.mubr.bf16.mxu0 0
    %606 = vmatmul.mubr.bf16.gmra.mrb[0].mxu0 %v515
    %v607 = vpop.f32.mrb[0].mxu0
    %v608 = vadd.f32 %v445, %v607
    %v609 = vpop.f32.mrb[0].mxu0
    %v610 = vpop.f32.mrb[0].mxu0
    %v611 = vadd.f32 %v450, %v610
    %v612 = vpop.f32.mrb[0].mxu0
    %613 = vdwg.mxu0
    %614 = vmatprep.subr.bf16.mxu0 0
    %615 = vmatpush1.bf16.msra.mxu0 %v352
    %616 = vmatprep.subr.bf16.mxu0 0
    %617 = vmatpush1.bf16.msra.mxu0 %v353
    %618 = vmatprep.subr.bf16.mxu0 0
    %619 = vmatpush1.bf16.msra.mxu0 %v354
    %620 = vmatprep.subr.bf16.mxu0 0
    %621 = vmatpush1.bf16.msra.mxu0 %v355
    %622 = vmatprep.subr.bf16.mxu0 0
    %623 = vmatpush1.bf16.msra.mxu0 0
    %624 = vmatprep.subr.bf16.mxu0 0
    %625 = vmatpush1.bf16.msra.mxu0 0
    %626 = vmatprep.subr.bf16.mxu0 0
    %627 = vmatpush1.bf16.msra.mxu0 0
    %628 = vmatprep.subr.bf16.mxu0 0
    %629 = vmatpush1.bf16.msra.mxu0 0
    %630 = vmatprep.subr.bf16.mxu0 0
    %631 = vmatpush1.bf16.msra.mxu0 0
    %632 = vmatprep.subr.bf16.mxu0 0
    %633 = vmatpush1.bf16.msra.mxu0 0
    %634 = vmatprep.subr.bf16.mxu0 0
    %635 = vmatpush1.bf16.msra.mxu0 0
    %636 = vmatprep.subr.bf16.mxu0 0
    %637 = vmatpush1.bf16.msra.mxu0 0
    %638 = vmatprep.subr.bf16.mxu0 0
    %639 = vmatpush1.bf16.msra.mxu0 0
    %640 = vmatprep.subr.bf16.mxu0 0
    %641 = vmatpush1.bf16.msra.mxu0 0
    %642 = vmatprep.subr.bf16.mxu0 0
    %643 = vmatpush1.bf16.msra.mxu0 0
    %644 = vmatprep.subr.bf16.mxu0 0
    %645 = vmatpush1.bf16.msra.mxu0 0
    %646 = vmatprep.mubr.bf16.mxu0 0
    %647 = vmatmul.mubr.bf16.gmra.mrb[0].mxu0 %v494
    %v648 = vpop.f32.mrb[0].mxu0
    %v649 = vadd.f32 %v375, %v648
    %v650 = vpop.f32.mrb[0].mxu0
    %v651 = vpop.f32.mrb[0].mxu0
    %v652 = vadd.f32 %v380, %v651
    %v653 = vpop.f32.mrb[0].mxu0
    %654 = vmatprep.mubr.bf16.mxu0 0
    %655 = vmatmul.mubr.bf16.gmra.mrb[0].mxu0 %v497
    %v656 = vpop.f32.mrb[0].mxu0
    %v657 = vadd.f32 %v385, %v656
    %v658 = vpop.f32.mrb[0].mxu0
    %v659 = vpop.f32.mrb[0].mxu0
    %v660 = vadd.f32 %v390, %v659
    %v661 = vpop.f32.mrb[0].mxu0
    %662 = vmatprep.mubr.bf16.mxu0 0
    %663 = vmatmul.mubr.bf16.gmra.mrb[0].mxu0 %v500
    %v664 = vpop.f32.mrb[0].mxu0
    %v665 = vadd.f32 %v395, %v664
    %v666 = vpop.f32.mrb[0].mxu0
    %v667 = vpop.f32.mrb[0].mxu0
    %v668 = vadd.f32 %v400, %v667
    %v669 = vpop.f32.mrb[0].mxu0
    %670 = vmatprep.mubr.bf16.mxu0 0
    %671 = vmatmul.mubr.bf16.gmra.mrb[0].mxu0 %v503
    %v672 = vpop.f32.mrb[0].mxu0
    %v673 = vadd.f32 %v405, %v672
    %v674 = vpop.f32.mrb[0].mxu0
    %v675 = vpop.f32.mrb[0].mxu0
    %v676 = vadd.f32 %v410, %v675
    %v677 = vpop.f32.mrb[0].mxu0
    %678 = vmatprep.mubr.bf16.mxu0 0
    %679 = vmatmul.mubr.bf16.gmra.mrb[0].mxu0 %v506
    %v680 = vpop.f32.mrb[0].mxu0
    %v681 = vadd.f32 %v415, %v680
    %v682 = vpop.f32.mrb[0].mxu0
    %v683 = vpop.f32.mrb[0].mxu0
    %v684 = vadd.f32 %v420, %v683
    %v685 = vpop.f32.mrb[0].mxu0
    %686 = vmatprep.mubr.bf16.mxu0 0
    %687 = vmatmul.mubr.bf16.gmra.mrb[0].mxu0 %v509
    %v688 = vpop.f32.mrb[0].mxu0
    %v689 = vadd.f32 %v425, %v688
    %v690 = vpop.f32.mrb[0].mxu0
    %v691 = vpop.f32.mrb[0].mxu0
    %v692 = vadd.f32 %v430, %v691
    %v693 = vpop.f32.mrb[0].mxu0
    %694 = vmatprep.mubr.bf16.mxu0 0
    %695 = vmatmul.mubr.bf16.gmra.mrb[0].mxu0 %v512
    %v696 = vpop.f32.mrb[0].mxu0
    %v697 = vadd.f32 %v435, %v696
    %v698 = vpop.f32.mrb[0].mxu0
    %v699 = vpop.f32.mrb[0].mxu0
    %v700 = vadd.f32 %v440, %v699
    %v701 = vpop.f32.mrb[0].mxu0
    %702 = vmatprep.mubr.bf16.mxu0 0
    %703 = vmatmul.mubr.bf16.gmra.mrb[0].mxu0 %v515
    %v704 = vpop.f32.mrb[0].mxu0
    %v705 = vadd.f32 %v445, %v704
    %v706 = vpop.f32.mrb[0].mxu0
    %v707 = vpop.f32.mrb[0].mxu0
    %v708 = vadd.f32 %v450, %v707
    %v709 = vpop.f32.mrb[0].mxu0
    %710 = vdwg.mxu0
    %v711 = vmax.f32 %v552, 0.0
    %v712 = vmax.f32 %v555, 0.0
    %v713 = vmax.f32 %v560, 0.0
    %v714 = vmax.f32 %v563, 0.0
    %v715 = vmax.f32 %v568, 0.0
    %v716 = vmax.f32 %v571, 0.0
    %v717 = vmax.f32 %v576, 0.0
    %v718 = vmax.f32 %v579, 0.0
    %v719 = vmax.f32 %v584, 0.0
    %v720 = vmax.f32 %v587, 0.0
    %v721 = vmax.f32 %v592, 0.0
    %v722 = vmax.f32 %v595, 0.0
    %v723 = vmax.f32 %v600, 0.0
    %v724 = vmax.f32 %v603, 0.0
    %v725 = vmax.f32 %v608, 0.0
    %v726 = vmax.f32 %v611, 0.0
    %v727 = vmax.f32 %v649, 0.0
    %v728 = vmax.f32 %v652, 0.0
    %v729 = vmax.f32 %v657, 0.0
    %v730 = vmax.f32 %v660, 0.0
    %v731 = vmax.f32 %v665, 0.0
    %v732 = vmax.f32 %v668, 0.0
    %v733 = vmax.f32 %v673, 0.0
    %v734 = vmax.f32 %v676, 0.0
    %v735 = vmax.f32 %v681, 0.0
    %v736 = vmax.f32 %v684, 0.0
    %v737 = vmax.f32 %v689, 0.0
    %v738 = vmax.f32 %v692, 0.0
    %v739 = vmax.f32 %v697, 0.0
    %v740 = vmax.f32 %v700, 0.0
    %v741 = vmax.f32 %v705, 0.0
    %v742 = vmax.f32 %v708, 0.0
    %v743 = vsel %vm492, %v711, -inf
    %744 = vmax.xlane.f32.xlu0 %v743
    %v745 = vpop.xlane.xlu0 %744
    %v746 = vsel %vm492, %v712, -inf
    %747 = vmax.xlane.f32.xlu0 %v746
    %v748 = vpop.xlane.xlu0 %747
    %v749 = vsel %vm492, %v713, -inf
    %750 = vmax.xlane.f32.xlu0 %v749
    %v751 = vpop.xlane.xlu0 %750
    %v752 = vsel %vm492, %v714, -inf
    %753 = vmax.xlane.f32.xlu0 %v752
    %v754 = vpop.xlane.xlu0 %753
    %v755 = vsel %vm492, %v715, -inf
    %756 = vmax.xlane.f32.xlu0 %v755
    %v757 = vpop.xlane.xlu0 %756
    %v758 = vsel %vm492, %v716, -inf
    %759 = vmax.xlane.f32.xlu0 %v758
    %v760 = vpop.xlane.xlu0 %759
    %v761 = vsel %vm492, %v717, -inf
    %762 = vmax.xlane.f32.xlu0 %v761
    %v763 = vpop.xlane.xlu0 %762
    %v764 = vsel %vm492, %v718, -inf
    %765 = vmax.xlane.f32.xlu0 %v764
    %v766 = vpop.xlane.xlu0 %765
    %v767 = vsel %vm492, %v719, -inf
    %768 = vmax.xlane.f32.xlu0 %v767
    %v769 = vpop.xlane.xlu0 %768
    %v770 = vsel %vm492, %v720, -inf
    %771 = vmax.xlane.f32.xlu0 %v770
    %v772 = vpop.xlane.xlu0 %771
    %v773 = vsel %vm492, %v721, -inf
    %774 = vmax.xlane.f32.xlu0 %v773
    %v775 = vpop.xlane.xlu0 %774
    %v776 = vsel %vm492, %v722, -inf
    %777 = vmax.xlane.f32.xlu0 %v776
    %v778 = vpop.xlane.xlu0 %777
    %v779 = vsel %vm492, %v723, -inf
    %780 = vmax.xlane.f32.xlu0 %v779
    %v781 = vpop.xlane.xlu0 %780
    %v782 = vsel %vm492, %v724, -inf
    %783 = vmax.xlane.f32.xlu0 %v782
    %v784 = vpop.xlane.xlu0 %783
    %v785 = vsel %vm492, %v725, -inf
    %786 = vmax.xlane.f32.xlu0 %v785
    %v787 = vpop.xlane.xlu0 %786
    %v788 = vsel %vm492, %v726, -inf
    %789 = vmax.xlane.f32.xlu0 %v788
    %v790 = vpop.xlane.xlu0 %789
    %v791 = vsel %vm492, %v727, -inf
    %792 = vmax.xlane.f32.xlu0 %v791
    %v793 = vpop.xlane.xlu0 %792
    %v794 = vsel %vm492, %v728, -inf
    %795 = vmax.xlane.f32.xlu0 %v794
    %v796 = vpop.xlane.xlu0 %795
    %v797 = vsel %vm492, %v729, -inf
    %798 = vmax.xlane.f32.xlu0 %v797
    %v799 = vpop.xlane.xlu0 %798
    %v800 = vsel %vm492, %v730, -inf
    %801 = vmax.xlane.f32.xlu0 %v800
    %v802 = vpop.xlane.xlu0 %801
    %v803 = vsel %vm492, %v731, -inf
    %804 = vmax.xlane.f32.xlu0 %v803
    %v805 = vpop.xlane.xlu0 %804
    %v806 = vsel %vm492, %v732, -inf
    %807 = vmax.xlane.f32.xlu0 %v806
    %v808 = vpop.xlane.xlu0 %807
    %v809 = vsel %vm492, %v733, -inf
    %810 = vmax.xlane.f32.xlu0 %v809
    %v811 = vpop.xlane.xlu0 %810
    %v812 = vsel %vm492, %v734, -inf
    %813 = vmax.xlane.f32.xlu0 %v812
    %v814 = vpop.xlane.xlu0 %813
    %v815 = vsel %vm492, %v735, -inf
    %816 = vmax.xlane.f32.xlu0 %v815
    %v817 = vpop.xlane.xlu0 %816
    %v818 = vsel %vm492, %v736, -inf
    %819 = vmax.xlane.f32.xlu0 %v818
    %v820 = vpop.xlane.xlu0 %819
    %v821 = vsel %vm492, %v737, -inf
    %822 = vmax.xlane.f32.xlu0 %v821
    %v823 = vpop.xlane.xlu0 %822
    %v824 = vsel %vm492, %v738, -inf
    %825 = vmax.xlane.f32.xlu0 %v824
    %v826 = vpop.xlane.xlu0 %825
    %v827 = vsel %vm492, %v739, -inf
    %828 = vmax.xlane.f32.xlu0 %v827
    %v829 = vpop.xlane.xlu0 %828
    %v830 = vsel %vm492, %v740, -inf
    %831 = vmax.xlane.f32.xlu0 %v830
    %v832 = vpop.xlane.xlu0 %831
    %v833 = vsel %vm492, %v741, -inf
    %834 = vmax.xlane.f32.xlu0 %v833
    %v835 = vpop.xlane.xlu0 %834
    %v836 = vsel %vm492, %v742, -inf
    %837 = vmax.xlane.f32.xlu0 %v836
    %v838 = vpop.xlane.xlu0 %837
    %v839 = vpack.c.bf16 %v748, %v745
    %v840 = vpack.c.bf16 %v754, %v751
    %v841 = vpack.c.bf16 %v760, %v757
    %v842 = vpack.c.bf16 %v766, %v763
    %v843 = vpack.c.bf16 %v772, %v769
    %v844 = vpack.c.bf16 %v778, %v775
    %v845 = vpack.c.bf16 %v784, %v781
    %v846 = vpack.c.bf16 %v790, %v787
    %v847 = vpack.c.bf16 %v796, %v793
    %v848 = vpack.c.bf16 %v802, %v799
    %v849 = vpack.c.bf16 %v808, %v805
    %v850 = vpack.c.bf16 %v814, %v811
    %v851 = vpack.c.bf16 %v820, %v817
    %v852 = vpack.c.bf16 %v826, %v823
    %v853 = vpack.c.bf16 %v832, %v829
    %v854 = vpack.c.bf16 %v838, %v835
    %v855 = vld [vmem:[%s5] sm:$0xff]
    %v856 = vld [vmem:[%s5 + $0x8] sm:$0xff]
    %v857 = vld [vmem:[%s5 + $0x10] sm:$0xff]
    %v858 = vld [vmem:[%s5 + $0x18] sm:$0xff]
    %v859 = vld [vmem:[%s5 + $0x20] sm:$0xff]
    %v860 = vld [vmem:[%s5 + $0x28] sm:$0xff]
    %v861 = vld [vmem:[%s5 + $0x30] sm:$0xff]
    %v862 = vld [vmem:[%s5 + $0x38] sm:$0xff]
    %v863 = vld [vmem:[%s5 + $0x40] sm:$0xff]
    %v864 = vld [vmem:[%s5 + $0x48] sm:$0xff]
    %v865 = vld [vmem:[%s5 + $0x50] sm:$0xff]
    %v866 = vld [vmem:[%s5 + $0x58] sm:$0xff]
    %v867 = vld [vmem:[%s5 + $0x60] sm:$0xff]
    %v868 = vld [vmem:[%s5 + $0x68] sm:$0xff]
    %v869 = vld [vmem:[%s5 + $0x70] sm:$0xff]
    %v870 = vld [vmem:[%s5 + $0x78] sm:$0xff]
    %v871 = vld [vmem:[%s6] sm:$0x3]
    %v873 = vlaneseq
    %v874 = vshrl.u32 %v873, 7
    %v875 = vsub.s32 0, %v874
    %v876 = vrot.slane %v871, %v875
    %v877 = vlaneseq
    %v878 = vshrl.u32 %v877, 7
    %v879 = vsub.s32 1, %v878
    %v880 = vrot.slane %v871, %v879
    %v899 = vunpack.c.l.b16 %v839
    %v900 = vunpack.c.h.b16 %v839
    %v901 = vunpack.c.l.b16 %v840
    %v902 = vunpack.c.h.b16 %v840
    %v903 = vunpack.c.l.b16 %v841
    %v904 = vunpack.c.h.b16 %v841
    %v905 = vunpack.c.l.b16 %v842
    %v906 = vunpack.c.h.b16 %v842
    %v907 = vunpack.c.l.b16 %v843
    %v908 = vunpack.c.h.b16 %v843
    %v909 = vunpack.c.l.b16 %v844
    %v910 = vunpack.c.h.b16 %v844
    %v911 = vunpack.c.l.b16 %v845
    %v912 = vunpack.c.h.b16 %v845
    %v913 = vunpack.c.l.b16 %v846
    %v914 = vunpack.c.h.b16 %v846
    %v915 = vunpack.c.l.b16 %v847
    %v916 = vunpack.c.h.b16 %v847
    %v917 = vunpack.c.l.b16 %v848
    %v918 = vunpack.c.h.b16 %v848
    %v919 = vunpack.c.l.b16 %v849
    %v920 = vunpack.c.h.b16 %v849
    %v921 = vunpack.c.l.b16 %v850
    %v922 = vunpack.c.h.b16 %v850
    %v923 = vunpack.c.l.b16 %v851
    %v924 = vunpack.c.h.b16 %v851
    %v925 = vunpack.c.l.b16 %v852
    %v926 = vunpack.c.h.b16 %v852
    %v927 = vunpack.c.l.b16 %v853
    %v928 = vunpack.c.h.b16 %v853
    %v929 = vunpack.c.l.b16 %v854
    %v930 = vunpack.c.h.b16 %v854
    %v931 = vlaneseq
    %v932 = vand.u32 %v931, 127
    %v933 = vlaneseq
    %v934 = vshrl.u32 %v933, 7
    %v935 = vsub.s32 %v932, %v934
    %v936 = vrot.slane %v899, %v935
    %v937 = vadd.s32 %v932, 4294967288
    %v938 = vlaneseq
    %v939 = vshrl.u32 %v938, 7
    %v940 = vsub.s32 %v937, %v939
    %v941 = vrot.slane %v900, %v940
    %vm942 = vcmask 130112
    %v943 = vsel %vm942, %v941, %v936
    %v944 = vadd.s32 %v932, 4294967280
    %v945 = vlaneseq
    %v946 = vshrl.u32 %v945, 7
    %v947 = vsub.s32 %v944, %v946
    %v948 = vrot.slane %v901, %v947
    %vm949 = vcmask 195712
    %v950 = vsel %vm949, %v948, %v943
    %v951 = vadd.s32 %v932, 4294967272
    %v952 = vlaneseq
    %v953 = vshrl.u32 %v952, 7
    %v954 = vsub.s32 %v951, %v953
    %v955 = vrot.slane %v902, %v954
    %vm956 = vcmask 261312
    %v957 = vsel %vm956, %v955, %v950
    %v958 = vadd.s32 %v932, 4294967264
    %v959 = vlaneseq
    %v960 = vshrl.u32 %v959, 7
    %v961 = vsub.s32 %v958, %v960
    %v962 = vrot.slane %v903, %v961
    %vm963 = vcmask 326912
    %v964 = vsel %vm963, %v962, %v957
    %v965 = vadd.s32 %v932, 4294967256
    %v966 = vlaneseq
    %v967 = vshrl.u32 %v966, 7
    %v968 = vsub.s32 %v965, %v967
    %v969 = vrot.slane %v904, %v968
    %vm970 = vcmask 392512
    %v971 = vsel %vm970, %v969, %v964
    %v972 = vadd.s32 %v932, 4294967248
    %v973 = vlaneseq
    %v974 = vshrl.u32 %v973, 7
    %v975 = vsub.s32 %v972, %v974
    %v976 = vrot.slane %v905, %v975
    %vm977 = vcmask 458112
    %v978 = vsel %vm977, %v976, %v971
    %v979 = vadd.s32 %v932, 4294967240
    %v980 = vlaneseq
    %v981 = vshrl.u32 %v980, 7
    %v982 = vsub.s32 %v979, %v981
    %v983 = vrot.slane %v906, %v982
    %vm984 = vcmask 523712
    %v985 = vsel %vm984, %v983, %v978
    %v986 = vadd.s32 %v932, 4294967232
    %v987 = vlaneseq
    %v988 = vshrl.u32 %v987, 7
    %v989 = vsub.s32 %v986, %v988
    %v990 = vrot.slane %v907, %v989
    %vm991 = vcmask 589312
    %v992 = vsel %vm991, %v990, %v985
    %v993 = vadd.s32 %v932, 4294967224
    %v994 = vlaneseq
    %v995 = vshrl.u32 %v994, 7
    %v996 = vsub.s32 %v993, %v995
    %v997 = vrot.slane %v908, %v996
    %vm998 = vcmask 654912
    %v999 = vsel %vm998, %v997, %v992
    %v1000 = vadd.s32 %v932, 4294967216
    %v1001 = vlaneseq
    %v1002 = vshrl.u32 %v1001, 7
    %v1003 = vsub.s32 %v1000, %v1002
    %v1004 = vrot.slane %v909, %v1003
    %vm1005 = vcmask 720512
    %v1006 = vsel %vm1005, %v1004, %v999
    %v1007 = vadd.s32 %v932, 4294967208
    %v1008 = vlaneseq
    %v1009 = vshrl.u32 %v1008, 7
    %v1010 = vsub.s32 %v1007, %v1009
    %v1011 = vrot.slane %v910, %v1010
    %vm1012 = vcmask 786112
    %v1013 = vsel %vm1012, %v1011, %v1006
    %v1014 = vadd.s32 %v932, 4294967200
    %v1015 = vlaneseq
    %v1016 = vshrl.u32 %v1015, 7
    %v1017 = vsub.s32 %v1014, %v1016
    %v1018 = vrot.slane %v911, %v1017
    %vm1019 = vcmask 851712
    %v1020 = vsel %vm1019, %v1018, %v1013
    %v1021 = vadd.s32 %v932, 4294967192
    %v1022 = vlaneseq
    %v1023 = vshrl.u32 %v1022, 7
    %v1024 = vsub.s32 %v1021, %v1023
    %v1025 = vrot.slane %v912, %v1024
    %vm1026 = vcmask 917312
    %v1027 = vsel %vm1026, %v1025, %v1020
    %v1028 = vadd.s32 %v932, 4294967184
    %v1029 = vlaneseq
    %v1030 = vshrl.u32 %v1029, 7
    %v1031 = vsub.s32 %v1028, %v1030
    %v1032 = vrot.slane %v913, %v1031
    %vm1033 = vcmask 982912
    %v1034 = vsel %vm1033, %v1032, %v1027
    %v1035 = vadd.s32 %v932, 4294967176
    %v1036 = vlaneseq
    %v1037 = vshrl.u32 %v1036, 7
    %v1038 = vsub.s32 %v1035, %v1037
    %v1039 = vrot.slane %v914, %v1038
    %vm1040 = vcmask 1048512
    %v1041 = vsel %vm1040, %v1039, %v1034
    %v1042 = vlaneseq
    %v1043 = vshrl.u32 %v1042, 7
    %v1044 = vsub.s32 %v932, %v1043
    %v1045 = vrot.slane %v915, %v1044
    %v1046 = vlaneseq
    %v1047 = vshrl.u32 %v1046, 7
    %v1048 = vsub.s32 %v937, %v1047
    %v1049 = vrot.slane %v916, %v1048
    %v1050 = vsel %vm942, %v1049, %v1045
    %v1051 = vlaneseq
    %v1052 = vshrl.u32 %v1051, 7
    %v1053 = vsub.s32 %v944, %v1052
    %v1054 = vrot.slane %v917, %v1053
    %v1055 = vsel %vm949, %v1054, %v1050
    %v1056 = vlaneseq
    %v1057 = vshrl.u32 %v1056, 7
    %v1058 = vsub.s32 %v951, %v1057
    %v1059 = vrot.slane %v918, %v1058
    %v1060 = vsel %vm956, %v1059, %v1055
    %v1061 = vlaneseq
    %v1062 = vshrl.u32 %v1061, 7
    %v1063 = vsub.s32 %v958, %v1062
    %v1064 = vrot.slane %v919, %v1063
    %v1065 = vsel %vm963, %v1064, %v1060
    %v1066 = vlaneseq
    %v1067 = vshrl.u32 %v1066, 7
    %v1068 = vsub.s32 %v965, %v1067
    %v1069 = vrot.slane %v920, %v1068
    %v1070 = vsel %vm970, %v1069, %v1065
    %v1071 = vlaneseq
    %v1072 = vshrl.u32 %v1071, 7
    %v1073 = vsub.s32 %v972, %v1072
    %v1074 = vrot.slane %v921, %v1073
    %v1075 = vsel %vm977, %v1074, %v1070
    %v1076 = vlaneseq
    %v1077 = vshrl.u32 %v1076, 7
    %v1078 = vsub.s32 %v979, %v1077
    %v1079 = vrot.slane %v922, %v1078
    %v1080 = vsel %vm984, %v1079, %v1075
    %v1081 = vlaneseq
    %v1082 = vshrl.u32 %v1081, 7
    %v1083 = vsub.s32 %v986, %v1082
    %v1084 = vrot.slane %v923, %v1083
    %v1085 = vsel %vm991, %v1084, %v1080
    %v1086 = vlaneseq
    %v1087 = vshrl.u32 %v1086, 7
    %v1088 = vsub.s32 %v993, %v1087
    %v1089 = vrot.slane %v924, %v1088
    %v1090 = vsel %vm998, %v1089, %v1085
    %v1091 = vlaneseq
    %v1092 = vshrl.u32 %v1091, 7
    %v1093 = vsub.s32 %v1000, %v1092
    %v1094 = vrot.slane %v925, %v1093
    %v1095 = vsel %vm1005, %v1094, %v1090
    %v1096 = vlaneseq
    %v1097 = vshrl.u32 %v1096, 7
    %v1098 = vsub.s32 %v1007, %v1097
    %v1099 = vrot.slane %v926, %v1098
    %v1100 = vsel %vm1012, %v1099, %v1095
    %v1101 = vlaneseq
    %v1102 = vshrl.u32 %v1101, 7
    %v1103 = vsub.s32 %v1014, %v1102
    %v1104 = vrot.slane %v927, %v1103
    %v1105 = vsel %vm1019, %v1104, %v1100
    %v1106 = vlaneseq
    %v1107 = vshrl.u32 %v1106, 7
    %v1108 = vsub.s32 %v1021, %v1107
    %v1109 = vrot.slane %v928, %v1108
    %v1110 = vsel %vm1026, %v1109, %v1105
    %v1111 = vlaneseq
    %v1112 = vshrl.u32 %v1111, 7
    %v1113 = vsub.s32 %v1028, %v1112
    %v1114 = vrot.slane %v929, %v1113
    %v1115 = vsel %vm1033, %v1114, %v1110
    %v1116 = vlaneseq
    %v1117 = vshrl.u32 %v1116, 7
    %v1118 = vsub.s32 %v1035, %v1117
    %v1119 = vrot.slane %v930, %v1118
    %v1120 = vsel %vm1040, %v1119, %v1115
    %vm1121 = vcmask 1041409
    %v1122 = vsel %vm1121, %v1120, %v1041
    %v1123 = vpack.c.b16 %v1122, %v1122
    %v1141 = vunpack.c.l.b16 %v855
    %v1142 = vunpack.c.h.b16 %v855
    %v1143 = vunpack.c.l.b16 %v856
    %v1144 = vunpack.c.h.b16 %v856
    %v1145 = vunpack.c.l.b16 %v857
    %v1146 = vunpack.c.h.b16 %v857
    %v1147 = vunpack.c.l.b16 %v858
    %v1148 = vunpack.c.h.b16 %v858
    %v1149 = vunpack.c.l.b16 %v859
    %v1150 = vunpack.c.h.b16 %v859
    %v1151 = vunpack.c.l.b16 %v860
    %v1152 = vunpack.c.h.b16 %v860
    %v1153 = vunpack.c.l.b16 %v861
    %v1154 = vunpack.c.h.b16 %v861
    %v1155 = vunpack.c.l.b16 %v862
    %v1156 = vunpack.c.h.b16 %v862
    %v1157 = vunpack.c.l.b16 %v863
    %v1158 = vunpack.c.h.b16 %v863
    %v1159 = vunpack.c.l.b16 %v864
    %v1160 = vunpack.c.h.b16 %v864
    %v1161 = vunpack.c.l.b16 %v865
    %v1162 = vunpack.c.h.b16 %v865
    %v1163 = vunpack.c.l.b16 %v866
    %v1164 = vunpack.c.h.b16 %v866
    %v1165 = vunpack.c.l.b16 %v867
    %v1166 = vunpack.c.h.b16 %v867
    %v1167 = vunpack.c.l.b16 %v868
    %v1168 = vunpack.c.h.b16 %v868
    %v1169 = vunpack.c.l.b16 %v869
    %v1170 = vunpack.c.h.b16 %v869
    %v1171 = vunpack.c.l.b16 %v870
    %v1172 = vunpack.c.h.b16 %v870
    %v1173 = vpack.c.b16 %v1143, %v1141
    %v1174 = vpack.c.b16 %v1144, %v1142
    %v1175 = vpack.c.b16 %v1147, %v1145
    %v1176 = vpack.c.b16 %v1148, %v1146
    %v1177 = vpack.c.b16 %v1151, %v1149
    %v1178 = vpack.c.b16 %v1152, %v1150
    %v1179 = vpack.c.b16 %v1155, %v1153
    %v1180 = vpack.c.b16 %v1156, %v1154
    %v1181 = vpack.c.b16 %v1159, %v1157
    %v1182 = vpack.c.b16 %v1160, %v1158
    %v1183 = vpack.c.b16 %v1163, %v1161
    %v1184 = vpack.c.b16 %v1164, %v1162
    %v1185 = vpack.c.b16 %v1167, %v1165
    %v1186 = vpack.c.b16 %v1168, %v1166
    %v1187 = vpack.c.b16 %v1171, %v1169
    %v1188 = vpack.c.b16 %v1172, %v1170
    %1205 = vmatprep.subr.bf16.mxu0 %v1174
    %1206 = vmatpush1.bf16.msra.mxu0 %v1173
    %1207 = vmatprep.subr.bf16.mxu0 %v1176
    %1208 = vmatpush1.bf16.msra.mxu0 %v1175
    %1209 = vmatprep.subr.bf16.mxu0 %v1178
    %1210 = vmatpush1.bf16.msra.mxu0 %v1177
    %1211 = vmatprep.subr.bf16.mxu0 %v1180
    %1212 = vmatpush1.bf16.msra.mxu0 %v1179
    %1213 = vmatprep.subr.bf16.mxu0 %v1182
    %1214 = vmatpush1.bf16.msra.mxu0 %v1181
    %1215 = vmatprep.subr.bf16.mxu0 %v1184
    %1216 = vmatpush1.bf16.msra.mxu0 %v1183
    %1217 = vmatprep.subr.bf16.mxu0 %v1186
    %1218 = vmatpush1.bf16.msra.mxu0 %v1185
    %1219 = vmatprep.subr.bf16.mxu0 %v1188
    %1220 = vmatpush1.bf16.msra.mxu0 %v1187
    %1221 = vmatprep.subr.bf16.mxu0 0
    %1222 = vmatpush1.bf16.msra.mxu0 0
    %1223 = vmatprep.subr.bf16.mxu0 0
    %1224 = vmatpush1.bf16.msra.mxu0 0
    %1225 = vmatprep.subr.bf16.mxu0 0
    %1226 = vmatpush1.bf16.msra.mxu0 0
    %1227 = vmatprep.subr.bf16.mxu0 0
    %1228 = vmatpush1.bf16.msra.mxu0 0
    %1229 = vmatprep.subr.bf16.mxu0 0
    %1230 = vmatpush1.bf16.msra.mxu0 0
    %1231 = vmatprep.subr.bf16.mxu0 0
    %1232 = vmatpush1.bf16.msra.mxu0 0
    %1233 = vmatprep.subr.bf16.mxu0 0
    %1234 = vmatpush1.bf16.msra.mxu0 0
    %1235 = vmatprep.subr.bf16.mxu0 0
    %1236 = vmatpush1.bf16.msra.mxu0 0
    %1237 = vmatprep.mubr.bf16.mxu0 0
    %1238 = vmatmul.mubr.bf16.gmra.mrb[0].mxu0 %v1123
    %v1239 = vpop.f32.mrb[0].mxu0
    %v1240 = vadd.f32 %v876, %v1239
    %v1241 = vpop.f32.mrb[0].mxu0
    %v1242 = vadd.f32 %v880, %v1241
    %v1243 = vpop.f32.mrb[0].mxu0
    %v1244 = vpop.f32.mrb[0].mxu0
    %1245 = vdwg.mxu0
    %v1246 = vmax.f32 %v1240, 0.0
    %v1247 = vmax.f32 %v1242, 0.0
    %v1248 = vpack.c.bf16 %v1246, %v1246
    %v1249 = vpack.c.bf16 %v1247, %v1247
    %v1250 = vld [vmem:[%s7] sm:$0xff]
    %v1251 = vld [vmem:[%s7 + $0x8] sm:$0xff]
    %v1252 = vld [vmem:[%s7 + $0x10] sm:$0xff]
    %v1253 = vld [vmem:[%s7 + $0x18] sm:$0xff]
    %v1254 = vld [vmem:[%s7 + $0x20] sm:$0xff]
    %v1255 = vld [vmem:[%s7 + $0x28] sm:$0xff]
    %v1256 = vld [vmem:[%s7 + $0x30] sm:$0xff]
    %v1257 = vld [vmem:[%s7 + $0x38] sm:$0xff]
    %v1258 = vld [vmem:[%s7 + $0x40] sm:$0xff]
    %v1259 = vld [vmem:[%s7 + $0x48] sm:$0xff]
    %v1260 = vld [vmem:[%s7 + $0x50] sm:$0xff]
    %v1261 = vld [vmem:[%s7 + $0x58] sm:$0xff]
    %v1262 = vld [vmem:[%s7 + $0x60] sm:$0xff]
    %v1263 = vld [vmem:[%s7 + $0x68] sm:$0xff]
    %v1264 = vld [vmem:[%s7 + $0x70] sm:$0xff]
    %v1265 = vld [vmem:[%s7 + $0x78] sm:$0xff]
    %v1266 = vld [vmem:[%s7 + $0x80] sm:$0xff]
    %v1267 = vld [vmem:[%s7 + $0x88] sm:$0xff]
    %v1268 = vld [vmem:[%s7 + $0x90] sm:$0xff]
    %v1269 = vld [vmem:[%s7 + $0x98] sm:$0xff]
    %v1270 = vld [vmem:[%s7 + $0xa0] sm:$0xff]
    %v1271 = vld [vmem:[%s7 + $0xa8] sm:$0xff]
    %v1272 = vld [vmem:[%s7 + $0xb0] sm:$0xff]
    %v1273 = vld [vmem:[%s7 + $0xb8] sm:$0xff]
    %v1274 = vld [vmem:[%s7 + $0xc0] sm:$0xff]
    %v1275 = vld [vmem:[%s7 + $0xc8] sm:$0xff]
    %v1276 = vld [vmem:[%s7 + $0xd0] sm:$0xff]
    %v1277 = vld [vmem:[%s7 + $0xd8] sm:$0xff]
    %v1278 = vld [vmem:[%s7 + $0xe0] sm:$0xff]
    %v1279 = vld [vmem:[%s7 + $0xe8] sm:$0xff]
    %v1280 = vld [vmem:[%s7 + $0xf0] sm:$0xff]
    %v1281 = vld [vmem:[%s7 + $0xf8] sm:$0xff]
    %v1282 = vld [vmem:[%s8] sm:$0x3]
    %v1284 = vlaneseq
    %v1285 = vshrl.u32 %v1284, 7
    %v1286 = vsub.s32 0, %v1285
    %v1287 = vrot.slane %v1282, %v1286
    %v1288 = vlaneseq
    %v1289 = vshrl.u32 %v1288, 7
    %v1290 = vsub.s32 1, %v1289
    %v1291 = vrot.slane %v1282, %v1290
    %v1326 = vunpack.c.l.b16 %v1250
    %v1327 = vunpack.c.h.b16 %v1250
    %v1328 = vunpack.c.l.b16 %v1251
    %v1329 = vunpack.c.h.b16 %v1251
    %v1330 = vunpack.c.l.b16 %v1252
    %v1331 = vunpack.c.h.b16 %v1252
    %v1332 = vunpack.c.l.b16 %v1253
    %v1333 = vunpack.c.h.b16 %v1253
    %v1334 = vunpack.c.l.b16 %v1254
    %v1335 = vunpack.c.h.b16 %v1254
    %v1336 = vunpack.c.l.b16 %v1255
    %v1337 = vunpack.c.h.b16 %v1255
    %v1338 = vunpack.c.l.b16 %v1256
    %v1339 = vunpack.c.h.b16 %v1256
    %v1340 = vunpack.c.l.b16 %v1257
    %v1341 = vunpack.c.h.b16 %v1257
    %v1342 = vunpack.c.l.b16 %v1258
    %v1343 = vunpack.c.h.b16 %v1258
    %v1344 = vunpack.c.l.b16 %v1259
    %v1345 = vunpack.c.h.b16 %v1259
    %v1346 = vunpack.c.l.b16 %v1260
    %v1347 = vunpack.c.h.b16 %v1260
    %v1348 = vunpack.c.l.b16 %v1261
    %v1349 = vunpack.c.h.b16 %v1261
    %v1350 = vunpack.c.l.b16 %v1262
    %v1351 = vunpack.c.h.b16 %v1262
    %v1352 = vunpack.c.l.b16 %v1263
    %v1353 = vunpack.c.h.b16 %v1263
    %v1354 = vunpack.c.l.b16 %v1264
    %v1355 = vunpack.c.h.b16 %v1264
    %v1356 = vunpack.c.l.b16 %v1265
    %v1357 = vunpack.c.h.b16 %v1265
    %v1358 = vunpack.c.l.b16 %v1266
    %v1359 = vunpack.c.h.b16 %v1266
    %v1360 = vunpack.c.l.b16 %v1267
    %v1361 = vunpack.c.h.b16 %v1267
    %v1362 = vunpack.c.l.b16 %v1268
    %v1363 = vunpack.c.h.b16 %v1268
    %v1364 = vunpack.c.l.b16 %v1269
    %v1365 = vunpack.c.h.b16 %v1269
    %v1366 = vunpack.c.l.b16 %v1270
    %v1367 = vunpack.c.h.b16 %v1270
    %v1368 = vunpack.c.l.b16 %v1271
    %v1369 = vunpack.c.h.b16 %v1271
    %v1370 = vunpack.c.l.b16 %v1272
    %v1371 = vunpack.c.h.b16 %v1272
    %v1372 = vunpack.c.l.b16 %v1273
    %v1373 = vunpack.c.h.b16 %v1273
    %v1374 = vunpack.c.l.b16 %v1274
    %v1375 = vunpack.c.h.b16 %v1274
    %v1376 = vunpack.c.l.b16 %v1275
    %v1377 = vunpack.c.h.b16 %v1275
    %v1378 = vunpack.c.l.b16 %v1276
    %v1379 = vunpack.c.h.b16 %v1276
    %v1380 = vunpack.c.l.b16 %v1277
    %v1381 = vunpack.c.h.b16 %v1277
    %v1382 = vunpack.c.l.b16 %v1278
    %v1383 = vunpack.c.h.b16 %v1278
    %v1384 = vunpack.c.l.b16 %v1279
    %v1385 = vunpack.c.h.b16 %v1279
    %v1386 = vunpack.c.l.b16 %v1280
    %v1387 = vunpack.c.h.b16 %v1280
    %v1388 = vunpack.c.l.b16 %v1281
    %v1389 = vunpack.c.h.b16 %v1281
    %v1390 = vpack.c.b16 %v1328, %v1326
    %v1391 = vpack.c.b16 %v1329, %v1327
    %v1392 = vpack.c.b16 %v1332, %v1330
    %v1393 = vpack.c.b16 %v1333, %v1331
    %v1394 = vpack.c.b16 %v1336, %v1334
    %v1395 = vpack.c.b16 %v1337, %v1335
    %v1396 = vpack.c.b16 %v1340, %v1338
    %v1397 = vpack.c.b16 %v1341, %v1339
    %v1398 = vpack.c.b16 %v1344, %v1342
    %v1399 = vpack.c.b16 %v1345, %v1343
    %v1400 = vpack.c.b16 %v1348, %v1346
    %v1401 = vpack.c.b16 %v1349, %v1347
    %v1402 = vpack.c.b16 %v1352, %v1350
    %v1403 = vpack.c.b16 %v1353, %v1351
    %v1404 = vpack.c.b16 %v1356, %v1354
    %v1405 = vpack.c.b16 %v1357, %v1355
    %v1406 = vpack.c.b16 %v1360, %v1358
    %v1407 = vpack.c.b16 %v1361, %v1359
    %v1408 = vpack.c.b16 %v1364, %v1362
    %v1409 = vpack.c.b16 %v1365, %v1363
    %v1410 = vpack.c.b16 %v1368, %v1366
    %v1411 = vpack.c.b16 %v1369, %v1367
    %v1412 = vpack.c.b16 %v1372, %v1370
    %v1413 = vpack.c.b16 %v1373, %v1371
    %v1414 = vpack.c.b16 %v1376, %v1374
    %v1415 = vpack.c.b16 %v1377, %v1375
    %v1416 = vpack.c.b16 %v1380, %v1378
    %v1417 = vpack.c.b16 %v1381, %v1379
    %v1418 = vpack.c.b16 %v1384, %v1382
    %v1419 = vpack.c.b16 %v1385, %v1383
    %v1420 = vpack.c.b16 %v1388, %v1386
    %v1421 = vpack.c.b16 %v1389, %v1387
    %1454 = vmatprep.subr.bf16.mxu0 %v1391
    %1455 = vmatpush1.bf16.msra.mxu0 %v1390
    %1456 = vmatprep.subr.bf16.mxu0 %v1393
    %1457 = vmatpush1.bf16.msra.mxu0 %v1392
    %1458 = vmatprep.subr.bf16.mxu0 %v1395
    %1459 = vmatpush1.bf16.msra.mxu0 %v1394
    %1460 = vmatprep.subr.bf16.mxu0 %v1397
    %1461 = vmatpush1.bf16.msra.mxu0 %v1396
    %1462 = vmatprep.subr.bf16.mxu0 %v1399
    %1463 = vmatpush1.bf16.msra.mxu0 %v1398
    %1464 = vmatprep.subr.bf16.mxu0 %v1401
    %1465 = vmatpush1.bf16.msra.mxu0 %v1400
    %1466 = vmatprep.subr.bf16.mxu0 %v1403
    %1467 = vmatpush1.bf16.msra.mxu0 %v1402
    %1468 = vmatprep.subr.bf16.mxu0 %v1405
    %1469 = vmatpush1.bf16.msra.mxu0 %v1404
    %1470 = vmatprep.subr.bf16.mxu0 %v1407
    %1471 = vmatpush1.bf16.msra.mxu0 %v1406
    %1472 = vmatprep.subr.bf16.mxu0 %v1409
    %1473 = vmatpush1.bf16.msra.mxu0 %v1408
    %1474 = vmatprep.subr.bf16.mxu0 %v1411
    %1475 = vmatpush1.bf16.msra.mxu0 %v1410
    %1476 = vmatprep.subr.bf16.mxu0 %v1413
    %1477 = vmatpush1.bf16.msra.mxu0 %v1412
    %1478 = vmatprep.subr.bf16.mxu0 %v1415
    %1479 = vmatpush1.bf16.msra.mxu0 %v1414
    %1480 = vmatprep.subr.bf16.mxu0 %v1417
    %1481 = vmatpush1.bf16.msra.mxu0 %v1416
    %1482 = vmatprep.subr.bf16.mxu0 %v1419
    %1483 = vmatpush1.bf16.msra.mxu0 %v1418
    %1484 = vmatprep.subr.bf16.mxu0 %v1421
    %1485 = vmatpush1.bf16.msra.mxu0 %v1420
    %1486 = vmatprep.mubr.bf16.mxu0 %v1249
    %1487 = vmatmul.mubr.bf16.gmra.mrb[0].mxu0 %v1248
    %v1488 = vpop.f32.mrb[0].mxu0
    %v1489 = vadd.f32 %v1287, %v1488
    %v1490 = vpop.f32.mrb[0].mxu0
    %v1491 = vadd.f32 %v1291, %v1490
    %v1492 = vpop.f32.mrb[0].mxu0
    %v1493 = vpop.f32.mrb[0].mxu0
    %1494 = vdwg.mxu0
    %v1497 = vcombine.low %v1489, %v1491
    %v1499 = vunpack.c.l.s4 1983009808
    %v1500 = vunpack.c.0.s8 %v1499
    %v1501 = vlaneseq
    %v1502 = vshrl.u32 %v1501, 7
    %v1503 = vsub.s32 %v1500, %v1502
    %v1504 = vrot.slane %v1497, %v1503
    %1506 = vst [vmem:[#allocation2] sm:$0xf] %v1504
    // Predicated region
    $region38: #{tpu_custom_call.1} parent=1 // pred_check
      _
    $region39: #{tpu_custom_call.1} parent=1 // pred_check_branch
      %1508 = sbr.rel (0) target = $region41
    $region40: #{tpu_custom_call.1} parent=1 // pred_region
      %s1510 = ssub.s32 64, 64
      %1511 = vsyncadd [#allocation3], %s1510
      %s1513 = sshll.u32 [#allocation2], 4
      %s1514 = int_to_ptr.vmem [resolvable:$true] %s1513
      %1516 = dma.vmem_to_hbm [thread:$0]  %s1514, 64, %s9, [#allocation3]
    $region41: #{tpu_custom_call.1} parent=1 // pred_fallthru
      _
    // Predicated region
    $region42: #{tpu_custom_call.1} parent=1 // pred_check
      _
    $region43: #{tpu_custom_call.1} parent=1 // pred_check_branch
      %1518 = sbr.rel (0) target = $region45
    $region44: #{tpu_custom_call.1} parent=1 // pred_region
      %1519 = dma.done [#allocation3], 64
    $region45: #{tpu_custom_call.1} parent=1 // pred_fallthru
      _
    %1520 = vsyncpa [#allocation3], 1

</llo_original>
